<compile_context>
chip_gen: v6e
topology: v6e:2x2x1
jax: 0.10.0
libtpu: 0.0.40
codegen_flags: <defaults>
</compile_context>

<pallas_src>
import functools

import jax
import jax.numpy as jnp
from jax.experimental import pallas as pl
from jax.experimental.pallas import tpu as pltpu


def _round_up(a, b):
    return (a + b - 1) // b * b


# ----------------------------- Pallas kernel --------------------------------
def _enc_block_kernel(p_ref, w_ref, shift_ref, o_ref, acc_ref):
    """Grid = (m_tiles, phases); phase axis is innermost ("arbitrary").

    p_ref:     [TM, CKK_pad]      im2col patches for (m-tile, phase)   (bf16/f32)
    w_ref:     [CKK_pad, COUT_pad] conv weights with BN scale folded   (bf16/f32)
    shift_ref: [1, COUT_pad]       conv bias + BN shift (f32)
    o_ref:     [TM, COUT_pad]      pooled output (f32)
    acc_ref:   [TM, COUT_pad]      f32 VMEM running-max accumulator
    """
    ph = pl.program_id(1)

    @pl.when(ph == 0)
    def _init():
        acc_ref[...] = jnp.full_like(acc_ref, -jnp.inf)

    # Convolution for this pool phase as an MXU matmul (f32 accumulation).
    y = jnp.dot(p_ref[...], w_ref[...], preferred_element_type=jnp.float32)
    # Fused conv-bias + (inference) BatchNorm shift, then ReLU.
    y = jnp.maximum(y + shift_ref[...], 0.0)
    # MaxPool = running elementwise max across the pool-window phases.
    acc_ref[...] = jnp.maximum(acc_ref[...], y)

    @pl.when(ph == pl.num_programs(1) - 1)
    def _finalize():
        o_ref[...] = acc_ref[...].astype(o_ref.dtype)


# ------------------------------- wrapper -------------------------------------
def lenet_enc_block(
    x_nchw,
    conv_w,        # [Cout, Cin, K, K]  (PyTorch OIHW)
    conv_b,        # [Cout]
    bn_gamma,      # [Cout]
    bn_beta,       # [Cout]
    bn_rmean,      # [Cout]
    bn_rvar,       # [Cout]
    *,
    conv_stride=2,
    pool_kernel=2,
    pool_stride=2,
    bn_eps=1e-5,
    operand_dtype=jnp.bfloat16,   # matmul operand dtype (accumulation is always f32)
    tile_m=256,                   # row tile for the M = N*Hp*Wp dimension
):
    N, Cin, H, W = x_nchw.shape
    Cout, _, K, _ = conv_w.shape

    Hout = (H - K) // conv_stride + 1
    Wout = (W - K) // conv_stride + 1
    Hp = (Hout - pool_kernel) // pool_stride + 1
    Wp = (Wout - pool_kernel) // pool_stride + 1
    CKK = Cin * K * K
    M = N * Hp * Wp
    P = pool_kernel * pool_kernel

    # Lane / sublane padding targets.
    CKK_pad = _round_up(CKK, 128)
    COUT_pad = _round_up(Cout, 128)
    TM = min(tile_m, _round_up(M, 16))      # multiple of 16 (bf16 sublane packing)
    M_pad = _round_up(M, TM)

    # ---- glue: im2col (index shuffling only) ----
    x_nhwc = jnp.transpose(x_nchw, (0, 2, 3, 1))  # [N, H, W, Cin]
    cols = []
    for kh in range(K):
        for kw in range(K):
            cols.append(
                x_nhwc[:,
                       kh: kh + conv_stride * (Hout - 1) + 1: conv_stride,
                       kw: kw + conv_stride * (Wout - 1) + 1: conv_stride,
                       :])                              # [N, Hout, Wout, Cin]
    patches = jnp.stack(cols, axis=3).reshape(N, Hout, Wout, CKK)  # (kh, kw, cin) order

    # ---- glue: ONE phase-major patch tensor [P, M, CKK] (single input stream) ----
    phase_rows = []
    for dh in range(pool_kernel):
        for dw in range(pool_kernel):
            g = patches[:,
                        dh: dh + pool_stride * (Hp - 1) + 1: pool_stride,
                        dw: dw + pool_stride * (Wp - 1) + 1: pool_stride,
                        :]                              # [N, Hp, Wp, CKK]
            phase_rows.append(g.reshape(M, CKK))
    patches_p = jnp.stack(phase_rows, axis=0)           # [P, M, CKK]
    patches_p = jnp.pad(patches_p,
                        ((0, 0), (0, M_pad - M), (0, CKK_pad - CKK)))
    patches_p = patches_p.astype(operand_dtype)

    # ---- glue: flatten weights, fold BN scale into columns, bias+BN into shift ----
    w_flat = jnp.transpose(conv_w, (2, 3, 1, 0)).reshape(CKK, Cout)  # (kh,kw,cin) x cout
    scale = bn_gamma / jnp.sqrt(bn_rvar + bn_eps)                    # [Cout]
    shift = bn_beta + scale * (conv_b - bn_rmean)                    # [Cout]
    w_scaled = (w_flat * scale[None, :]).astype(jnp.float32)
    w_pad = jnp.pad(w_scaled, ((0, CKK_pad - CKK), (0, COUT_pad - Cout)))
    w_pad = w_pad.astype(operand_dtype)
    shift_pad = jnp.pad(shift.reshape(1, Cout).astype(jnp.float32),
                        ((0, 0), (0, COUT_pad - Cout)))

    # ---- Pallas call: conv-matmul + BN + ReLU + MaxPool, tiled & pipelined ----
    grid = (M_pad // TM, P)
    out_flat = pl.pallas_call(
        _enc_block_kernel,
        out_shape=jax.ShapeDtypeStruct((M_pad, COUT_pad), jnp.float32),
        grid_spec=pltpu.PrefetchScalarGridSpec(
            num_scalar_prefetch=0,
            grid=grid,
            in_specs=[
                # patches: phase dim squeezed; re-DMA'd per (m-tile, phase) -> pipelined
                pl.BlockSpec((None, TM, CKK_pad), lambda i, p: (p, i, 0)),
                # weights / shift: constant block index -> DMA'd once, stays in VMEM
                pl.BlockSpec((CKK_pad, COUT_pad), lambda i, p: (0, 0)),
                pl.BlockSpec((1, COUT_pad), lambda i, p: (0, 0)),
            ],
            out_specs=pl.BlockSpec((TM, COUT_pad), lambda i, p: (i, 0)),
            scratch_shapes=[pltpu.VMEM((TM, COUT_pad), jnp.float32)],
        ),
        compiler_params=pltpu.CompilerParams(
            dimension_semantics=("parallel", "arbitrary"),
        ),
    )(patches_p, w_pad, shift_pad)

    # strip padding, back to NCHW
    out = out_flat[:M, :Cout].reshape(N, Hp, Wp, Cout)
    return jnp.transpose(out, (0, 3, 1, 2))  # [N, Cout, Hp, Wp]


# ------------------------------ reference ------------------------------------
def reference_forward(x, conv_w, conv_b, gamma, beta, rmean, rvar,
                      conv_stride=2, pool_kernel=2, pool_stride=2, eps=1e-5):
    y = jax.lax.conv_general_dilated(
        x, conv_w, window_strides=(conv_stride, conv_stride), padding="VALID",
        dimension_numbers=("NCHW", "OIHW", "NCHW"))
    y = y + conv_b[None, :, None, None]
    y = (y - rmean[None, :, None, None]) / jnp.sqrt(rvar[None, :, None, None] + eps)
    y = y * gamma[None, :, None, None] + beta[None, :, None, None]
    y = jnp.maximum(y, 0.0)
    y = jax.lax.reduce_window(
        y, -jnp.inf, jax.lax.max,
        window_dimensions=(1, 1, pool_kernel, pool_kernel),
        window_strides=(1, 1, pool_stride, pool_stride),
        padding="VALID")
    return y


# -------------------------------- main ----------------------------------------
if __name__ == "__main__":
    N, Cin, H, W = 2, 4, 16, 16
    Cout, K = 8, 5

    key = jax.random.PRNGKey(0)
    kx, kw, kb, kg, kbeta, km, kv = jax.random.split(key, 7)

    x = jax.random.normal(kx, (N, Cin, H, W), dtype=jnp.float32)

    # deterministic synthetic parameters (shapes per nn.Conv2d / nn.BatchNorm2d)
    conv_w = 0.1 * jax.random.normal(kw, (Cout, Cin, K, K), dtype=jnp.float32)
    conv_b = 0.1 * jax.random.normal(kb, (Cout,), dtype=jnp.float32)
    bn_gamma = 1.0 + 0.1 * jax.random.normal(kg, (Cout,), dtype=jnp.float32)
    bn_beta = 0.1 * jax.random.normal(kbeta, (Cout,), dtype=jnp.float32)
    bn_rmean = 0.1 * jax.random.normal(km, (Cout,), dtype=jnp.float32)
    bn_rvar = jax.random.uniform(kv, (Cout,), minval=0.5, maxval=1.5, dtype=jnp.float32)

    ref = reference_forward(x, conv_w, conv_b, bn_gamma, bn_beta, bn_rmean, bn_rvar)
    ref = jax.block_until_ready(ref)

    # Default (bf16 matmul operands, f32 accumulation) -> looser tolerance.
    fn_bf16 = jax.jit(lenet_enc_block)
    out = jax.block_until_ready(
        fn_bf16(x, conv_w, conv_b, bn_gamma, bn_beta, bn_rmean, bn_rvar))
    assert out.shape == (N, Cout, 3, 3), out.shape
    assert jnp.allclose(out, ref, atol=2e-2, rtol=2e-2), (
        float(jnp.max(jnp.abs(out - ref))))

    # f32-operand path: tight check that the kernel structure (im2col, BN folding,
    # ReLU-before-pool, padding/tiling bookkeeping) matches the reference exactly.
    fn_f32 = jax.jit(functools.partial(lenet_enc_block, operand_dtype=jnp.float32))
    out32 = jax.block_until_ready(
        fn_f32(x, conv_w, conv_b, bn_gamma, bn_beta, bn_rmean, bn_rvar))
    assert jnp.allclose(out32, ref, atol=1e-4, rtol=1e-4), (
        float(jnp.max(jnp.abs(out32 - ref))))

    print("KERNEL_OK")
</pallas_src>

<mosaic_0001>
module attributes {stable_mosaic.version = 11 : i64} {
  func.func @_enc_block_kernel(%arg0: i32, %arg1: i32, %arg2: memref<1x32x128xbf16, #tpu.memory_space<vmem>>, %arg3: memref<128x128xbf16, #tpu.memory_space<vmem>>, %arg4: memref<1x128xf32, #tpu.memory_space<vmem>>, %arg5: memref<32x128xf32, #tpu.memory_space<vmem>>, %arg6: memref<32x128xf32, #tpu.memory_space<vmem>>) attributes {dimension_semantics = [#tpu.dimension_semantics<parallel>, #tpu.dimension_semantics<arbitrary>], iteration_bounds = array<i64: 1, 4>, scalar_prefetch = 0 : i64, scratch_operands = 1 : i64, tpu.core_type = #tpu.core_type<tc>, window_params = [{transform_indices = @transform_0, window_bounds = array<i64: 1, 32, 128>}, {pipeline_mode = #tpu.pipeline_mode<synchronous>, transform_indices = @transform_1, window_bounds = array<i64: 128, 128>}, {pipeline_mode = #tpu.pipeline_mode<synchronous>, transform_indices = @transform_2, window_bounds = array<i64: 1, 128>}, {transform_indices = @transform_3, window_bounds = array<i64: 32, 128>}]} {
    %c0_i32 = arith.constant 0 : i32
    %0 = arith.cmpi eq, %arg1, %c0_i32 : i32
    %1 = arith.extui %0 : i1 to i32
    %c0_i32_0 = arith.constant 0 : i32
    %2 = arith.cmpi ne, %1, %c0_i32_0 : i32
    scf.if %2 {
      %cst_13 = arith.constant 0xFF800000 : f32
      %18 = vector.broadcast %cst_13 : f32 to vector<32x128xf32>
      %c0_14 = arith.constant 0 : index
      %c0_15 = arith.constant 0 : index
      %19 = vector.load %arg6[%c0_14, %c0_15] : memref<32x128xf32, #tpu.memory_space<vmem>>, vector<32x128xf32>
      tpu.vector_store %arg6[%c0_14, %c0_15], %18 {strides = array<i32>} : memref<32x128xf32, #tpu.memory_space<vmem>>, vector<32x128xf32>,
    } else {
    }
    %c0 = arith.constant 0 : index
    %c0_1 = arith.constant 0 : index
    %c0_2 = arith.constant 0 : index
    %3 = vector.load %arg2[%c0, %c0_1, %c0_2] : memref<1x32x128xbf16, #tpu.memory_space<vmem>>, vector<1x32x128xbf16>
    %4 = vector.shape_cast %3 : vector<1x32x128xbf16> to vector<32x128xbf16>
    %c0_3 = arith.constant 0 : index
    %c0_4 = arith.constant 0 : index
    %5 = vector.load %arg3[%c0_3, %c0_4] : memref<128x128xbf16, #tpu.memory_space<vmem>>, vector<128x128xbf16>
    %cst = arith.constant dense<0.000000e+00> : vector<32x128xf32>
    %6 = tpu.matmul %4, %5, %cst {dimension_numbers = #tpu.dot_dimension_numbers<[1], [0], [0], [1], [0, 0, 1, 1], [], []>} : vector<32x128xbf16>, vector<128x128xbf16>, vector<32x128xf32> -> vector<32x128xf32>
    %c0_5 = arith.constant 0 : index
    %c0_6 = arith.constant 0 : index
    %7 = vector.load %arg4[%c0_5, %c0_6] : memref<1x128xf32, #tpu.memory_space<vmem>>, vector<1x128xf32>
    %8 = vector.broadcast %7 : vector<1x128xf32> to vector<32x128xf32>
    %9 = arith.addf %6, %8 : vector<32x128xf32>
    %cst_7 = arith.constant 0.000000e+00 : f32
    %10 = vector.broadcast %cst_7 : f32 to vector<32x128xf32>
    %11 = arith.maximumf %9, %10 : vector<32x128xf32>
    %c0_8 = arith.constant 0 : index
    %c0_9 = arith.constant 0 : index
    %12 = vector.load %arg6[%c0_8, %c0_9] : memref<32x128xf32, #tpu.memory_space<vmem>>, vector<32x128xf32>
    %13 = arith.maximumf %12, %11 : vector<32x128xf32>
    %c0_10 = arith.constant 0 : index
    %c0_11 = arith.constant 0 : index
    %14 = vector.load %arg6[%c0_10, %c0_11] : memref<32x128xf32, #tpu.memory_space<vmem>>, vector<32x128xf32>
    tpu.vector_store %arg6[%c0_10, %c0_11], %13 {strides = array<i32>} : memref<32x128xf32, #tpu.memory_space<vmem>>, vector<32x128xf32>,
    %c3_i32 = arith.constant 3 : i32
    %15 = arith.cmpi eq, %arg1, %c3_i32 : i32
    %16 = arith.extui %15 : i1 to i32
    %c0_i32_12 = arith.constant 0 : i32
    %17 = arith.cmpi ne, %16, %c0_i32_12 : i32
    scf.if %17 {
      %c0_13 = arith.constant 0 : index
      %c0_14 = arith.constant 0 : index
      %18 = vector.load %arg6[%c0_13, %c0_14] : memref<32x128xf32, #tpu.memory_space<vmem>>, vector<32x128xf32>
      %c0_15 = arith.constant 0 : index
      %c0_16 = arith.constant 0 : index
      %19 = vector.load %arg5[%c0_15, %c0_16] : memref<32x128xf32, #tpu.memory_space<vmem>>, vector<32x128xf32>
      tpu.vector_store %arg5[%c0_15, %c0_16], %18 {strides = array<i32>} : memref<32x128xf32, #tpu.memory_space<vmem>>, vector<32x128xf32>,
    } else {
    }
    return
  }
  func.func @transform_0(%arg0: i32, %arg1: i32) -> (i32, i32, i32) {
    %c0_i32 = arith.constant 0 : i32
    %c0_i32_0 = arith.constant 0 : i32
    return %arg1, %arg0, %c0_i32 : i32, i32, i32
  }
  func.func @transform_1(%arg0: i32, %arg1: i32) -> (i32, i32) {
    %c0_i32 = arith.constant 0 : i32
    %c0_i32_0 = arith.constant 0 : i32
    %c0_i32_1 = arith.constant 0 : i32
    return %c0_i32, %c0_i32_0 : i32, i32
  }
  func.func @transform_2(%arg0: i32, %arg1: i32) -> (i32, i32) {
    %c0_i32 = arith.constant 0 : i32
    %c0_i32_0 = arith.constant 0 : i32
    %c0_i32_1 = arith.constant 0 : i32
    return %c0_i32, %c0_i32_0 : i32, i32
  }
  func.func @transform_3(%arg0: i32, %arg1: i32) -> (i32, i32) {
    %c0_i32 = arith.constant 0 : i32
    %c0_i32_0 = arith.constant 0 : i32
    return %arg0, %c0_i32 : i32, i32
  }
}

</mosaic_0001>

<llo_original>
// kernel: lenet_enc_block.1
$region0: #{lenet_enc_block.1}
  #allocation0 [shape = 'u32[]', space=smem, size = 0x4, offset = 0x4, fixed_abs, tag = 'smem constant byte address 0x4 - core index']
  #allocation1 [shape = 'u32[144,128]{1,0:T(1,128)}', space=vmem, size = 0x12000, scoped, tag = 'internal scratch']
  #allocation2 [shape = 'f32[32,128]{1,0:T(8,128)}', space=vmem, size = 0x4000, scoped, tag = 'scratch operand']
  %s0 = inlined_call_operand.vmem [shape: bf16[4,32,128], index: 0, kind: input, shape index: {}]
  %s1 = inlined_call_operand.vmem [shape: bf16[128,128], index: 1, kind: input, shape index: {}]
  %s2 = inlined_call_operand.vmem [shape: f32[1,128], index: 2, kind: input, shape index: {}]
  %s3 = inlined_call_operand.vmem [shape: f32[32,128], index: 3, kind: output, shape index: {}]
  %s4 = sld [smem:[#allocation0]]
  $region53: #{lenet_enc_block.1} parent=0
    _
  %s6 = ssub.s32 1, %s4
  %s7 = scalar_select 0, %s6, %s4
  loop: start=0, step=1, limit=6
  $region2: #{lenet_enc_block.1} parent=0 // loop_pre_header
    _
  $region3: #{lenet_enc_block.1} parent=0 // loop_header
    %s9 = sphi 0, %s13
    %p10 = scmp.ge.s32.totalorder %s9, 6
    %s16 = sphi 0, %s28
    %s17 = sphi 0, %s24
    %s18 = sphi 0, %s16
    %s19 = sphi 0, %s17
    %s20 = sphi 0, %s18
    %s21 = sphi 0, %s19
    %s33 = sphi 0, %s35
    %s36 = sphi 0, %s33
    %s37 = sphi 0, %s36
    %s53 = sphi 0, %s37
    %s57 = sphi 0, %s57
    %s59 = sphi 0, %s57
    %s60 = sphi 0, %s59
    %s74 = sphi 0, %s60
    %s78 = sphi 0, %s78
    %s80 = sphi 0, %s78
    %s81 = sphi 0, %s80
    %s95 = sphi 0, %s81
    %s101 = sphi 0, %s103
    %s104 = sphi 0, %s101
    %s105 = sphi 0, %s104
    %s121 = sphi 0, %s105
  $region4: #{lenet_enc_block.1} parent=0 // loop_header_branch
    %12 = sbr.rel (%p10) target = $region8
  $region5: #{lenet_enc_block.1} parent=0 // loop_body
    %s14 = ssub.s32 %s9, 1
    %s15 = ssub.s32 %s9, 2
    %s22 = sadd.s32 1, %s17
    %p23 = scmp.ge.s32.totalorder %s22, 4
    %s24 = scalar_select %p23, 0, %s22
    %s25 = sadd.s32 1, %s16
    %s26 = scalar_select %p23, %s25, %s16
    %p27 = scmp.ge.s32.totalorder %s26, 1
    %s28 = scalar_select %p27, 0, %s26
    %s29 = ssub.s32 %s17, %s24
    %s30 = ssub.s32 %s16, %s28
    %s31 = sor.u32 %s29, %s30
    %p32 = scmp.eq.s32.totalorder %s31, 0
    %s34 = sadd.s32 %s33, 1
    %s35 = scalar_select %p32, %s33, %s34
    %p38 = pneg %p32
    %p39 = scmp.eq.s32.totalorder %s9, 3
    %p40 = por %p38, %p39
    %p41 = scmp.ne.s32.totalorder %s33, %s36
    %p42 = scmp.eq.s32.totalorder %s9, 0
    %p43 = por %p41, %p42
    %p44 = scmp.ne.s32.totalorder %s33, %s36
    %p45 = scmp.eq.s32.totalorder %s14, 3
    %p46 = por %p44, %p45
    %p47 = scmp.ne.s32.totalorder %s36, %s37
    %p48 = scmp.eq.s32.totalorder %s14, 0
    %p49 = por %p47, %p48
    %p50 = scmp.ne.s32.totalorder %s36, %s37
    %p51 = scmp.eq.s32.totalorder %s15, 3
    %p52 = por %p50, %p51
    %p54 = scmp.ne.s32.totalorder %s37, %s53
    %p55 = scmp.eq.s32.totalorder %s15, 0
    %p56 = por %p54, %p55
    %s58 = sadd.s32 %s57, 1
    %p61 = scmp.eq.s32.totalorder %s9, 3
    %p62 = scmp.ne.s32.totalorder %s57, %s59
    %p63 = scmp.eq.s32.totalorder %s9, 0
    %p64 = por %p62, %p63
    %p65 = scmp.ne.s32.totalorder %s57, %s59
    %p66 = scmp.eq.s32.totalorder %s14, 3
    %p67 = por %p65, %p66
    %p68 = scmp.ne.s32.totalorder %s59, %s60
    %p69 = scmp.eq.s32.totalorder %s14, 0
    %p70 = por %p68, %p69
    %p71 = scmp.ne.s32.totalorder %s59, %s60
    %p72 = scmp.eq.s32.totalorder %s15, 3
    %p73 = por %p71, %p72
    %p75 = scmp.ne.s32.totalorder %s60, %s74
    %p76 = scmp.eq.s32.totalorder %s15, 0
    %p77 = por %p75, %p76
    %s79 = sadd.s32 %s78, 1
    %p82 = scmp.eq.s32.totalorder %s9, 3
    %p83 = scmp.ne.s32.totalorder %s78, %s80
    %p84 = scmp.eq.s32.totalorder %s9, 0
    %p85 = por %p83, %p84
    %p86 = scmp.ne.s32.totalorder %s78, %s80
    %p87 = scmp.eq.s32.totalorder %s14, 3
    %p88 = por %p86, %p87
    %p89 = scmp.ne.s32.totalorder %s80, %s81
    %p90 = scmp.eq.s32.totalorder %s14, 0
    %p91 = por %p89, %p90
    %p92 = scmp.ne.s32.totalorder %s80, %s81
    %p93 = scmp.eq.s32.totalorder %s15, 3
    %p94 = por %p92, %p93
    %p96 = scmp.ne.s32.totalorder %s81, %s95
    %p97 = scmp.eq.s32.totalorder %s15, 0
    %p98 = por %p96, %p97
    %s99 = ssub.s32 %s16, %s28
    %p100 = scmp.eq.s32.totalorder %s99, 0
    %s102 = sadd.s32 %s101, 1
    %s103 = scalar_select %p100, %s101, %s102
    %p106 = pneg %p100
    %p107 = scmp.eq.s32.totalorder %s9, 3
    %p108 = por %p106, %p107
    %p109 = scmp.ne.s32.totalorder %s101, %s104
    %p110 = scmp.eq.s32.totalorder %s9, 0
    %p111 = por %p109, %p110
    %p112 = scmp.ne.s32.totalorder %s101, %s104
    %p113 = scmp.eq.s32.totalorder %s14, 3
    %p114 = por %p112, %p113
    %p115 = scmp.ne.s32.totalorder %s104, %s105
    %p116 = scmp.eq.s32.totalorder %s14, 0
    %p117 = por %p115, %p116
    %p118 = scmp.ne.s32.totalorder %s104, %s105
    %p119 = scmp.eq.s32.totalorder %s15, 3
    %p120 = por %p118, %p119
    %p122 = scmp.ne.s32.totalorder %s105, %s121
    %p123 = scmp.eq.s32.totalorder %s15, 0
    %p124 = por %p122, %p123
    %p125 = scmp.le.s32.totalorder 1, %s9
    %p126 = scmp.lt.s32.totalorder %s9, 5
    %p127 = pnand %p125, %p126
    %p128 = pneg %p127
    // Predicated region
    $region9: #{lenet_enc_block.1} parent=5 // pred_check
      _
    $region10: #{lenet_enc_block.1} parent=5 // pred_check_branch
      %130 = sbr.rel (%p127) target = $region12
    $region11: #{lenet_enc_block.1} parent=5 // pred_region
      %s131 = ssub.s32 %s9, 1
      // Predicated region
      $region13: #{lenet_enc_block.1} parent=11 // pred_check
        %p132 = pneg %p70
      $region14: #{lenet_enc_block.1} parent=11 // pred_check_branch
        %134 = sbr.rel (%p132) target = $region16
      $region15: #{lenet_enc_block.1} parent=11 // pred_region
        _
      $region16: #{lenet_enc_block.1} parent=11 // pred_fallthru
        _
      // Predicated region
      $region17: #{lenet_enc_block.1} parent=11 // pred_check
        %p135 = pneg %p91
      $region18: #{lenet_enc_block.1} parent=11 // pred_check_branch
        %137 = sbr.rel (%p135) target = $region20
      $region19: #{lenet_enc_block.1} parent=11 // pred_region
        _
      $region20: #{lenet_enc_block.1} parent=11 // pred_fallthru
        _
    $region12: #{lenet_enc_block.1} parent=5 // pred_fallthru
      _
    %p138 = scmp.lt.s32.totalorder %s9, 4
    // Predicated region
    $region21: #{lenet_enc_block.1} parent=5 // pred_check
      %p139 = pneg %p138
    $region22: #{lenet_enc_block.1} parent=5 // pred_check_branch
      %141 = sbr.rel (%p139) target = $region24
    $region23: #{lenet_enc_block.1} parent=5 // pred_region
      // Predicated region
      $region25: #{lenet_enc_block.1} parent=23 // pred_check
        %p142 = pneg %p43
      $region26: #{lenet_enc_block.1} parent=23 // pred_check_branch
        %144 = sbr.rel (%p142) target = $region28
      $region27: #{lenet_enc_block.1} parent=23 // pred_region
        %s145 = smul.u32 4, %s16
        %p146 = scmp.lt.s32.totalorder %s17, 3
        %s147 = scalar_select %p146, %s17, 3
        %p148 = scmp.lt.s32.totalorder %s145, 3
        %s149 = scalar_select %p148, %s145, 3
        %s150 = smul.addr %s147, 4
        %s151 = sadd.s32 %s149, %s150
        %s152 = smul.addr %s151, 4
        %s153 = scalar_lea.vmem %s0, %s152
        %s154 = smul.u32 4, %s16
      $region28: #{lenet_enc_block.1} parent=23 // pred_fallthru
        _
    $region24: #{lenet_enc_block.1} parent=5 // pred_fallthru
      _
    %p155 = scmp.le.s32.totalorder 1, %s9
    %p156 = scmp.lt.s32.totalorder %s9, 5
    %p157 = pnand %p155, %p156
    %p158 = pneg %p157
    // Predicated region
    $region29: #{lenet_enc_block.1} parent=5 // pred_check
      _
    $region30: #{lenet_enc_block.1} parent=5 // pred_check_branch
      %160 = sbr.rel (%p157) target = $region32
    $region31: #{lenet_enc_block.1} parent=5 // pred_region
      %s161 = ssub.s32 %s9, 1
      %s162 = smul.u32 4, %s18
      %p163 = scmp.lt.s32.totalorder %s19, 3
      %s164 = scalar_select %p163, %s19, 3
      %p165 = scmp.lt.s32.totalorder %s162, 3
      %s166 = scalar_select %p165, %s162, 3
      %s167 = smul.addr %s164, 4
      %s168 = sadd.s32 %s166, %s167
      %s169 = smul.addr %s168, 4
      %s170 = scalar_lea.vmem %s0, %s169
      %p171 = pneg %p49
      %p172 = pneg %p46
      %p173 = pneg %p70
      %p174 = pneg %p67
      %p175 = pneg %p91
      %p176 = pneg %p88
      %p177 = pneg %p117
      %p178 = pneg %p114
      %s179 = smul.u32 4, %s18
      %p180 = scmp.lt.s32.totalorder %s179, 3
      %s181 = scalar_select %p180, %s179, 3
      %s182 = smul.addr %s181, 8
      %s183 = scalar_lea.vmem %s3, %s182
      %s184 = smul.u32 4, %s18
      %p185 = scmp.lt.s32.totalorder %s19, 3
      %s186 = scalar_select %p185, %s19, 3
      %p187 = scmp.lt.s32.totalorder %s184, 3
      %s188 = scalar_select %p187, %s184, 3
      %s189 = smul.addr %s186, 4
      %s190 = sadd.s32 %s188, %s189
      %s191 = smul.addr %s190, 4
      %s192 = scalar_lea.vmem %s0, %s191
      %s193 = smul.u32 4, %s18
      %s194 = smul.u32 4, %s18
      %p195 = scmp.lt.s32.totalorder %s194, 3
      %s196 = scalar_select %p195, %s194, 3
      %s197 = smul.addr %s196, 8
      %s198 = scalar_lea.vmem %s3, %s197
      %s199 = smul.u32 4, %s18
      %p201 = scmp.eq.s32.totalorder %s19, 0
      // Predicated region
      $region33: #{lenet_enc_block.1} parent=31 // pred_check
        %p202 = pneg %p201
      $region34: #{lenet_enc_block.1} parent=31 // pred_check_branch
        %204 = sbr.rel (%p202) target = $region36
      $region35: #{lenet_enc_block.1} parent=31 // pred_region
        %205 = vst [vmem:[#allocation2] sm:$0xff] -inf
        %206 = vst [vmem:[#allocation2 + $0x8] sm:$0xff] -inf
        %207 = vst [vmem:[#allocation2 + $0x10] sm:$0xff] -inf
        %208 = vst [vmem:[#allocation2 + $0x18] sm:$0xff] -inf
      $region36: #{lenet_enc_block.1} parent=31 // pred_fallthru
        _
      %v209 = vld [vmem:[%s192] sm:$0xf]
      %v210 = vld [vmem:[%s192 + $0x4] sm:$0xf]
      %v211 = vld [vmem:[%s192 + $0x8] sm:$0xf]
      %v212 = vld [vmem:[%s192 + $0xc] sm:$0xf]
      %v213 = vld [vmem:[%s1] sm:$0xf]
      %v214 = vld [vmem:[%s1 + $0x4] sm:$0xf]
      %v215 = vld [vmem:[%s1 + $0x8] sm:$0xf]
      %v216 = vld [vmem:[%s1 + $0xc] sm:$0xf]
      %v217 = vld [vmem:[%s1 + $0x10] sm:$0xf]
      %v218 = vld [vmem:[%s1 + $0x14] sm:$0xf]
      %v219 = vld [vmem:[%s1 + $0x18] sm:$0xf]
      %v220 = vld [vmem:[%s1 + $0x1c] sm:$0xf]
      %v221 = vld [vmem:[%s1 + $0x20] sm:$0xf]
      %v222 = vld [vmem:[%s1 + $0x24] sm:$0xf]
      %v223 = vld [vmem:[%s1 + $0x28] sm:$0xf]
      %v224 = vld [vmem:[%s1 + $0x2c] sm:$0xf]
      %v225 = vld [vmem:[%s1 + $0x30] sm:$0xf]
      %v226 = vld [vmem:[%s1 + $0x34] sm:$0xf]
      %v227 = vld [vmem:[%s1 + $0x38] sm:$0xf]
      %v228 = vld [vmem:[%s1 + $0x3c] sm:$0xf]
      %v229 = vld [vmem:[%s2] sm:$0x1]
      %v231 = vlaneseq
      %v232 = vshrl.u32 %v231, 7
      %v233 = vsub.s32 0, %v232
      %v234 = vrot.slane %v229, %v233
      %v240 = vunpack.c.l.b16 %v209
      %v241 = vunpack.c.l.b16 %v210
      %v242 = vunpack.c.l.b16 %v211
      %v243 = vunpack.c.l.b16 %v212
      %v244 = vpack.c.b16 %v241, %v240
      %v245 = vpack.c.b16 %v243, %v242
      %v264 = vunpack.c.l.b16 %v213
      %v265 = vunpack.c.l.b16 %v214
      %v266 = vunpack.c.l.b16 %v215
      %v267 = vunpack.c.l.b16 %v216
      %v268 = vunpack.c.l.b16 %v217
      %v269 = vunpack.c.l.b16 %v218
      %v270 = vunpack.c.l.b16 %v219
      %v271 = vunpack.c.l.b16 %v220
      %v272 = vunpack.c.l.b16 %v221
      %v273 = vunpack.c.l.b16 %v222
      %v274 = vunpack.c.l.b16 %v223
      %v275 = vunpack.c.l.b16 %v224
      %v276 = vunpack.c.l.b16 %v225
      %v277 = vunpack.c.l.b16 %v226
      %v278 = vunpack.c.l.b16 %v227
      %v279 = vunpack.c.l.b16 %v228
      %v280 = vpack.c.b16 %v265, %v264
      %v281 = vpack.c.b16 %v267, %v266
      %v282 = vpack.c.b16 %v269, %v268
      %v283 = vpack.c.b16 %v271, %v270
      %v284 = vpack.c.b16 %v273, %v272
      %v285 = vpack.c.b16 %v275, %v274
      %v286 = vpack.c.b16 %v277, %v276
      %v287 = vpack.c.b16 %v279, %v278
      %296 = vmatprep.subr.bf16.mxu0 0
      %297 = vmatpush1.bf16.msra.mxu0 %v287
      %298 = vmatprep.subr.bf16.mxu0 0
      %299 = vmatpush1.bf16.msra.mxu0 %v286
      %300 = vmatprep.subr.bf16.mxu0 0
      %301 = vmatpush1.bf16.msra.mxu0 %v285
      %302 = vmatprep.subr.bf16.mxu0 0
      %303 = vmatpush1.bf16.msra.mxu0 %v284
      %304 = vmatprep.subr.bf16.mxu0 0
      %305 = vmatpush1.bf16.msra.mxu0 %v283
      %306 = vmatprep.subr.bf16.mxu0 0
      %307 = vmatpush1.bf16.msra.mxu0 %v282
      %308 = vmatprep.subr.bf16.mxu0 0
      %309 = vmatpush1.bf16.msra.mxu0 %v281
      %310 = vmatprep.subr.bf16.mxu0 0
      %311 = vmatpush1.bf16.msra.mxu0 %v280
      %312 = vmatprep.subr.bf16.mxu0 0
      %313 = vmatpush2.bf16.msra.mxu0 0
      %314 = vmatprep.subr.bf16.mxu0 0
      %315 = vmatpush2.bf16.msra.mxu0 0
      %316 = vmatprep.subr.bf16.mxu0 0
      %317 = vmatpush2.bf16.msra.mxu0 0
      %318 = vmatprep.subr.bf16.mxu0 0
      %319 = vmatpush2.bf16.msra.mxu0 0
      %320 = vmatprep.subr.bf16.mxu0 0
      %321 = vmatpush2.bf16.msra.mxu0 0
      %322 = vmatprep.subr.bf16.mxu0 0
      %323 = vmatpush2.bf16.msra.mxu0 0
      %324 = vmatprep.subr.bf16.mxu0 0
      %325 = vmatpush2.bf16.msra.mxu0 0
      %326 = vmatprep.subr.bf16.mxu0 0
      %327 = vmatpush2.bf16.msra.mxu0 0
      %328 = vmatprep.mubr.bf16.mxu0 0
      %329 = vmatmul.mubr.bf16.gmra.mxu0 %v244
      %v330 = vpop.f32.mrf.mxu0
      %v331 = vadd.f32 %v234, %v330
      %v332 = vpop.f32.mrf.mxu0
      %v333 = vpop.f32.mrf.mxu0
      %v334 = vadd.f32 %v234, %v333
      %v335 = vpop.f32.mrf.mxu0
      %336 = vmatprep.mubr.bf16.mxu0 0
      %337 = vmatmul.mubr.bf16.gmra.mxu0 %v245
      %v338 = vpop.f32.mrf.mxu0
      %v339 = vadd.f32 %v234, %v338
      %v340 = vpop.f32.mrf.mxu0
      %v341 = vpop.f32.mrf.mxu0
      %v342 = vadd.f32 %v234, %v341
      %v343 = vpop.f32.mrf.mxu0
      %344 = vdwg.mxu0
      %v345 = vmax.f32 %v331, 0.0
      %v346 = vmax.f32 %v334, 0.0
      %v347 = vmax.f32 %v339, 0.0
      %v348 = vmax.f32 %v342, 0.0
      %v349 = vld [vmem:[#allocation2] sm:$0xff]
      %v350 = vld [vmem:[#allocation2 + $0x8] sm:$0xff]
      %v351 = vld [vmem:[#allocation2 + $0x10] sm:$0xff]
      %v352 = vld [vmem:[#allocation2 + $0x18] sm:$0xff]
      %v353 = vmax.f32 %v349, %v345
      %v354 = vmax.f32 %v350, %v346
      %v355 = vmax.f32 %v351, %v347
      %v356 = vmax.f32 %v352, %v348
      %357 = vst [vmem:[#allocation2] sm:$0xff] %v353
      %358 = vst [vmem:[#allocation2 + $0x8] sm:$0xff] %v354
      %359 = vst [vmem:[#allocation2 + $0x10] sm:$0xff] %v355
      %360 = vst [vmem:[#allocation2 + $0x18] sm:$0xff] %v356
      %p361 = scmp.eq.s32.totalorder %s19, 3
      // Predicated region
      $region37: #{lenet_enc_block.1} parent=31 // pred_check
        %p362 = pneg %p361
      $region38: #{lenet_enc_block.1} parent=31 // pred_check_branch
        %364 = sbr.rel (%p362) target = $region40
      $region39: #{lenet_enc_block.1} parent=31 // pred_region
        %v365 = vld [vmem:[#allocation2] sm:$0xff]
        %v366 = vld [vmem:[#allocation2 + $0x8] sm:$0xff]
        %v367 = vld [vmem:[#allocation2 + $0x10] sm:$0xff]
        %v368 = vld [vmem:[#allocation2 + $0x18] sm:$0xff]
        %369 = vst [vmem:[%s198] sm:$0xff] %v365
        %370 = vst [vmem:[%s198 + $0x8] sm:$0xff] %v366
        %371 = vst [vmem:[%s198 + $0x10] sm:$0xff] %v367
        %372 = vst [vmem:[%s198 + $0x18] sm:$0xff] %v368
      $region40: #{lenet_enc_block.1} parent=31 // pred_fallthru
        _
      %s373 = smul.u32 4, %s18
      %p374 = scmp.lt.s32.totalorder %s373, 3
      %s375 = scalar_select %p374, %s373, 3
      %s376 = smul.addr %s375, 8
      %s377 = scalar_lea.vmem %s3, %s376
      // Predicated region
      $region41: #{lenet_enc_block.1} parent=31 // pred_check
        %p378 = pneg %p114
      $region42: #{lenet_enc_block.1} parent=31 // pred_check_branch
        %380 = sbr.rel (%p378) target = $region44
      $region43: #{lenet_enc_block.1} parent=31 // pred_region
        %s381 = smul.u32 4, %s18
      $region44: #{lenet_enc_block.1} parent=31 // pred_fallthru
        _
      // Predicated region
      $region45: #{lenet_enc_block.1} parent=31 // pred_check
        %p382 = pneg %p114
      $region46: #{lenet_enc_block.1} parent=31 // pred_check_branch
        %384 = sbr.rel (%p382) target = $region48
      $region47: #{lenet_enc_block.1} parent=31 // pred_region
        %s385 = smul.u32 4, %s18
        %p386 = scmp.lt.s32.totalorder %s385, 3
        %s387 = scalar_select %p386, %s385, 3
        %s388 = smul.addr %s387, 8
        %s389 = scalar_lea.vmem %s3, %s388
      $region48: #{lenet_enc_block.1} parent=31 // pred_fallthru
        _
    $region32: #{lenet_enc_block.1} parent=5 // pred_fallthru
      _
    %p390 = scmp.le.s32.totalorder 2, %s9
    // Predicated region
    $region49: #{lenet_enc_block.1} parent=5 // pred_check
      %p391 = pneg %p390
    $region50: #{lenet_enc_block.1} parent=5 // pred_check_branch
      %393 = sbr.rel (%p391) target = $region52
    $region51: #{lenet_enc_block.1} parent=5 // pred_region
      %s394 = ssub.s32 %s9, 2
    $region52: #{lenet_enc_block.1} parent=5 // pred_fallthru
      _
  $region6: #{lenet_enc_block.1} parent=0 // loop_footer
    %s13 = sadd.s32 1, %s9
  $region7: #{lenet_enc_block.1} parent=0 // loop_footer_branch
    %8 = sbr.rel target = $region3
  $region8: #{lenet_enc_block.1} parent=0 // loop_exit
    _

</llo_original>
